<compile_context>
chip_gen: v5e
topology: v5e:2x2
jax: 0.10.0
libtpu: 0.0.40
codegen_flags: <defaults>
</compile_context>

<pallas_src>
import functools

import jax
import jax.numpy as jnp
from jax.experimental import pallas as pl
from jax.experimental.pallas import tpu as pltpu


def _norm_kernel(x_ref, alpha_ref, bias_ref, o_ref, *, eps):
    # x_ref: (block_rows, d_model); alpha_ref / bias_ref: (1, d_model)
    x = x_ref[...]
    if x.dtype != jnp.float32:          # trace-time branch: no-op for f32 inputs
        x = x.astype(jnp.float32)
    d = x.shape[-1]
    mean = jnp.mean(x, axis=-1, keepdims=True)
    xc = x - mean
    # Unbiased variance (ddof=1) to match torch.std's default.
    var = jnp.sum(xc * xc, axis=-1, keepdims=True) / jnp.float32(d - 1)
    std = jnp.sqrt(var)
    # Per-row reciprocal: (block_rows, 1) of work instead of a full-tile divide.
    inv = pl.reciprocal(std + jnp.float32(eps), approx=False)

    alpha = alpha_ref[...]
    bias = bias_ref[...]
    if alpha.dtype != jnp.float32:
        alpha = alpha.astype(jnp.float32)
    if bias.dtype != jnp.float32:
        bias = bias.astype(jnp.float32)

    o_ref[...] = ((xc * inv) * alpha + bias).astype(o_ref.dtype)


def _vmem_capacity_bytes():
    """Physical VMEM of the current chip; conservative default if unknown."""
    try:
        return int(pltpu.get_tpu_info().vmem_capacity_bytes)
    except Exception:
        return 64 * 1024 * 1024  # assume the tightest (v7x-class) budget


def _round_up(n, m):
    return -(-n // m) * m


def _pick_block_rows(rows, d_model, itemsize, vmem_capacity):
    """Large, VMEM-safe row tile (multiple of 8; 16 for 2-byte dtypes)."""
    row_align = 16 if itemsize == 2 else 8
    bytes_per_row = max(1, d_model * itemsize)
    small_vmem = vmem_capacity <= 64 * 1024 * 1024  # v7x-class part

    # Input-tile byte target: ~4 MiB on 128 MiB parts with f32 I/O; ~2 MiB when
    # either VMEM is tight (v7x) or the kernel will materialize f32 copies of a
    # 2-byte input tile.
    if itemsize == 2 or small_vmem:
        target_tile_bytes = 2 * 1024 * 1024
    else:
        target_tile_bytes = 4 * 1024 * 1024

    br = max(row_align, (target_tile_bytes // bytes_per_row // row_align) * row_align)

    # Aim for >= 8 grid steps so the DMA prologue/epilogue is hidden and the
    # two TensorCores (v7x) get balanced work -- but never shrink a tile below
    # ~2 MiB, where per-step overhead starts to show.
    min_rows_2mib = max(
        row_align, ((2 * 1024 * 1024) // bytes_per_row // row_align) * row_align
    )
    if rows > 8 * row_align:
        per_step = _round_up(-(-rows // 8), row_align)   # ceil(rows/8), aligned
        per_step = max(per_step, min_rows_2mib)
        br = min(br, per_step)

    # No point in a block bigger than the (rounded-up) row count.
    br = min(br, _round_up(rows, row_align))
    return max(br, row_align)


def _vmem_limit_bytes(block_rows, d_model, itemsize, vmem_capacity):
    tile_bytes = block_rows * d_model * itemsize
    f32_tile = block_rows * d_model * 4
    needed = 4 * tile_bytes                 # in + out tiles, double-buffered
    if itemsize != 4:
        needed += 2 * f32_tile              # x.astype(f32) and xc temporaries
    else:
        needed += f32_tile                  # xc temporary
    needed += 2 * d_model * 4               # alpha / bias
    needed += 1 << 20                       # Mosaic internal scratch slack
    cap = 40 * 1024 * 1024 if vmem_capacity <= 64 * 1024 * 1024 else 48 * 1024 * 1024
    return int(min(cap, max(32 * 1024 * 1024, needed)))


def norm_forward(x, alpha, bias, eps=1e-6, block_rows=None):
    """Pallas implementation of Norm.forward. x: (..., d_model)."""
    orig_shape = x.shape
    d_model = orig_shape[-1]
    assert d_model >= 2, "ddof=1 std requires d_model >= 2"

    x2 = x.reshape(-1, d_model)
    rows = x2.shape[0]
    itemsize = x2.dtype.itemsize
    vmem_capacity = _vmem_capacity_bytes()

    if block_rows is None:
        block_rows = _pick_block_rows(rows, d_model, itemsize, vmem_capacity)

    alpha2 = alpha.reshape(1, d_model)
    bias2 = bias.reshape(1, d_model)

    # No padding: Pallas handles the partial last block (tail writes are
    # discarded; per-row math on garbage tail rows is harmless since rows are
    # independent).
    grid = (pl.cdiv(rows, block_rows),)

    vmem_limit = _vmem_limit_bytes(block_rows, d_model, itemsize, vmem_capacity)

    kernel = functools.partial(_norm_kernel, eps=eps)

    out = pl.pallas_call(
        kernel,
        out_shape=jax.ShapeDtypeStruct((rows, d_model), x.dtype),
        grid_spec=pltpu.PrefetchScalarGridSpec(
            num_scalar_prefetch=0,
            grid=grid,
            in_specs=[
                pl.BlockSpec((block_rows, d_model), lambda i: (i, 0)),
                pl.BlockSpec((1, d_model), lambda i: (0, 0)),
                pl.BlockSpec((1, d_model), lambda i: (0, 0)),
            ],
            out_specs=pl.BlockSpec((block_rows, d_model), lambda i: (i, 0)),
        ),
        compiler_params=pltpu.CompilerParams(
            dimension_semantics=("parallel",),
            vmem_limit_bytes=vmem_limit,
        ),
    )(x2, alpha2, bias2)

    return out.reshape(orig_shape)


if __name__ == "__main__":
    key = jax.random.PRNGKey(0)
    # Small demo shapes consistent with the module (d_model=32).  For real
    # benchmarking use d_model % 128 == 0 (lane-dense stores).
    batch, seq, d_model = 2, 8, 32

    x = jax.random.normal(key, (batch, seq, d_model), dtype=jnp.float32)
    # Deterministic parameter init (as in the module's __init__).
    alpha = jnp.ones((d_model,), dtype=jnp.float32)
    bias = jnp.zeros((d_model,), dtype=jnp.float32)

    out = norm_forward(x, alpha, bias, eps=1e-6)
    out = jax.block_until_ready(out)

    # Pure-JAX reference (unbiased std, eps added to std — torch semantics).
    mean = jnp.mean(x, axis=-1, keepdims=True)
    std = jnp.sqrt(jnp.sum((x - mean) ** 2, axis=-1, keepdims=True) / (d_model - 1))
    ref = alpha * (x - mean) / (std + 1e-6) + bias
    assert jnp.allclose(out, ref, atol=1e-5, rtol=1e-5), "mismatch vs reference"

    print("KERNEL_OK")
</pallas_src>

<mosaic_0001>
module attributes {stable_mosaic.version = 11 : i64} {
  func.func @_norm_kernel(%arg0: i32, %arg1: memref<16x32xf32, #tpu.memory_space<vmem>>, %arg2: memref<1x32xf32, #tpu.memory_space<vmem>>, %arg3: memref<1x32xf32, #tpu.memory_space<vmem>>, %arg4: memref<16x32xf32, #tpu.memory_space<vmem>>) attributes {dimension_semantics = [#tpu.dimension_semantics<parallel>], iteration_bounds = array<i64: 1>, scalar_prefetch = 0 : i64, scratch_operands = 0 : i64, tpu.core_type = #tpu.core_type<tc>, window_params = [{transform_indices = @transform_0, window_bounds = array<i64: 16, 32>}, {pipeline_mode = #tpu.pipeline_mode<synchronous>, transform_indices = @transform_1, window_bounds = array<i64: 1, 32>}, {pipeline_mode = #tpu.pipeline_mode<synchronous>, transform_indices = @transform_2, window_bounds = array<i64: 1, 32>}, {transform_indices = @transform_3, window_bounds = array<i64: 16, 32>}]} {
    %c0 = arith.constant 0 : index
    %c0_0 = arith.constant 0 : index
    %0 = vector.load %arg1[%c0, %c0_0] : memref<16x32xf32, #tpu.memory_space<vmem>>, vector<16x32xf32>
    %cst = arith.constant dense<0.000000e+00> : vector<16xf32>
    %1 = vector.multi_reduction <add>, %0, %cst [1] : vector<16x32xf32> to vector<16xf32>
    %2 = vector.shape_cast %1 : vector<16xf32> to vector<16x1xf32>
    %cst_1 = arith.constant 3.200000e+01 : f32
    %3 = vector.broadcast %cst_1 : f32 to vector<16x1xf32>
    %4 = arith.divf %2, %3 : vector<16x1xf32>
    %5 = vector.broadcast %4 : vector<16x1xf32> to vector<16x32xf32>
    %6 = arith.subf %0, %5 : vector<16x32xf32>
    %7 = arith.mulf %6, %6 : vector<16x32xf32>
    %cst_2 = arith.constant dense<0.000000e+00> : vector<16xf32>
    %8 = vector.multi_reduction <add>, %7, %cst_2 [1] : vector<16x32xf32> to vector<16xf32>
    %9 = vector.shape_cast %8 : vector<16xf32> to vector<16x1xf32>
    %cst_3 = arith.constant 3.100000e+01 : f32
    %10 = vector.broadcast %cst_3 : f32 to vector<16x1xf32>
    %11 = arith.divf %9, %10 : vector<16x1xf32>
    %12 = math.sqrt %11 : vector<16x1xf32>
    %cst_4 = arith.constant 9.99999997E-7 : f32
    %13 = vector.broadcast %cst_4 : f32 to vector<16x1xf32>
    %14 = arith.addf %12, %13 : vector<16x1xf32>
    %15 = tpu.reciprocal %14 : vector<16x1xf32> -> vector<16x1xf32>
    %c0_5 = arith.constant 0 : index
    %c0_6 = arith.constant 0 : index
    %16 = vector.load %arg2[%c0_5, %c0_6] : memref<1x32xf32, #tpu.memory_space<vmem>>, vector<1x32xf32>
    %c0_7 = arith.constant 0 : index
    %c0_8 = arith.constant 0 : index
    %17 = vector.load %arg3[%c0_7, %c0_8] : memref<1x32xf32, #tpu.memory_space<vmem>>, vector<1x32xf32>
    %18 = vector.broadcast %15 : vector<16x1xf32> to vector<16x32xf32>
    %19 = arith.mulf %6, %18 : vector<16x32xf32>
    %20 = vector.broadcast %16 : vector<1x32xf32> to vector<16x32xf32>
    %21 = arith.mulf %19, %20 : vector<16x32xf32>
    %22 = vector.broadcast %17 : vector<1x32xf32> to vector<16x32xf32>
    %23 = arith.addf %21, %22 : vector<16x32xf32>
    %c0_9 = arith.constant 0 : index
    %c0_10 = arith.constant 0 : index
    %24 = vector.load %arg4[%c0_9, %c0_10] : memref<16x32xf32, #tpu.memory_space<vmem>>, vector<16x32xf32>
    tpu.vector_store %arg4[%c0_9, %c0_10], %23 {strides = array<i32>} : memref<16x32xf32, #tpu.memory_space<vmem>>, vector<16x32xf32>,
    return
  }
  func.func @transform_0(%arg0: i32) -> (i32, i32) {
    %c0_i32 = arith.constant 0 : i32
    %c0_i32_0 = arith.constant 0 : i32
    return %arg0, %c0_i32 : i32, i32
  }
  func.func @transform_1(%arg0: i32) -> (i32, i32) {
    %c0_i32 = arith.constant 0 : i32
    %c0_i32_0 = arith.constant 0 : i32
    %c0_i32_1 = arith.constant 0 : i32
    return %c0_i32, %c0_i32_0 : i32, i32
  }
  func.func @transform_2(%arg0: i32) -> (i32, i32) {
    %c0_i32 = arith.constant 0 : i32
    %c0_i32_0 = arith.constant 0 : i32
    %c0_i32_1 = arith.constant 0 : i32
    return %c0_i32, %c0_i32_0 : i32, i32
  }
  func.func @transform_3(%arg0: i32) -> (i32, i32) {
    %c0_i32 = arith.constant 0 : i32
    %c0_i32_0 = arith.constant 0 : i32
    return %arg0, %c0_i32 : i32, i32
  }
}

</mosaic_0001>

<llo_original>
// kernel: tpu_custom_call.1
$region0: #{tpu_custom_call.1}
  #allocation0 [shape = 'u32[]', space=smem, size = 0x4, offset = 0x4, fixed_abs, tag = 'smem constant byte address 0x4 - core index']
  #allocation1 [shape = 'u32[72,128]{1,0:T(1,128)}', space=vmem, size = 0x9000, scoped, tag = 'internal scratch']
  %s0 = inlined_call_operand.hbm [shape: f32[16,32], index: 0, kind: input, shape index: {}]
  %s1 = inlined_call_operand.hbm [shape: f32[1,32], index: 1, kind: input, shape index: {}]
  %s2 = inlined_call_operand.vmem [shape: f32[1,32], index: 2, kind: input, shape index: {}]
  %s3 = inlined_call_operand.hbm [shape: f32[16,32], index: 3, kind: output, shape index: {}]
  %s4 = sld [smem:[#allocation0]]
  $region30: #{tpu_custom_call.1} parent=0
    _
  %s6 = ssub.s32 1, %s4
  %s7 = scalar_select 0, %s6, %s4
  $region1: #{tpu_custom_call.1} parent=0
    #allocation2 [shape = 'u8[8192]{0}', space=vmem, size = 0x2000, scoped, tag = 'input window, operand 0, single buffered']
    #allocation3 [shape = 's32[1]{0}', space=sflag, size = 0x4, scoped, tag = 'scoped memory for tpu_custom_call.1']
    #allocation4 [shape = 's32[1]{0}', space=sflag, size = 0x4, scoped, tag = 'scoped memory for tpu_custom_call.1']
    #allocation5 [shape = 'u8[512]{0}', space=vmem, size = 0x400, scoped, tag = 'input window, operand 1, single buffered']
    #allocation6 [shape = 's32[1]{0}', space=sflag, size = 0x4, scoped, tag = 'scoped memory for tpu_custom_call.1']
    #allocation7 [shape = 'u8[8192]{0}', space=vmem, size = 0x2000, scoped, tag = 'output window, operand 0, single buffered']
    %8 = vsyncpa [#allocation3], 0
    %9 = vsyncpa [#allocation6], 0
    %10 = vsyncpa [#allocation4], 0
    // Predicated region
    $region2: #{tpu_custom_call.1} parent=1 // pred_check
      _
    $region3: #{tpu_custom_call.1} parent=1 // pred_check_branch
      %12 = sbr.rel (0) target = $region5
    $region4: #{tpu_custom_call.1} parent=1 // pred_region
      %14 = vsyncadd [#allocation3], 0
      %s15 = sshll.u32 %s0, 4
      %s16 = int_to_ptr.hbm [resolvable:$true] %s15
      %s17 = sshll.u32 [#allocation2], 4
      %s18 = int_to_ptr.vmem [resolvable:$true] %s17
      %23 = dma.hbm_to_vmem [thread:$0]  %s16, 256, %s18, [#allocation3], 128, 128, 8
    $region5: #{tpu_custom_call.1} parent=1 // pred_fallthru
      _
    // Predicated region
    $region6: #{tpu_custom_call.1} parent=1 // pred_check
      _
    $region7: #{tpu_custom_call.1} parent=1 // pred_check_branch
      %25 = sbr.rel (0) target = $region9
    $region8: #{tpu_custom_call.1} parent=1 // pred_region
      %27 = vsyncadd [#allocation6], 0
      %s29 = sshll.u32 %s1, 4
      %s30 = int_to_ptr.hbm [resolvable:$true] %s29
      %s31 = sshll.u32 [#allocation5], 4
      %s32 = int_to_ptr.vmem [resolvable:$true] %s31
      %34 = dma.hbm_to_vmem [thread:$0]  %s30, 16, %s32, [#allocation6]
    $region9: #{tpu_custom_call.1} parent=1 // pred_fallthru
      _
    // Predicated region
    $region10: #{tpu_custom_call.1} parent=1 // pred_check
      _
    $region11: #{tpu_custom_call.1} parent=1 // pred_check_branch
      %36 = sbr.rel (0) target = $region13
    $region12: #{tpu_custom_call.1} parent=1 // pred_region
      _
    $region13: #{tpu_custom_call.1} parent=1 // pred_fallthru
      _
    // Predicated region
    $region14: #{tpu_custom_call.1} parent=1 // pred_check
      _
    $region15: #{tpu_custom_call.1} parent=1 // pred_check_branch
      %38 = sbr.rel (0) target = $region17
    $region16: #{tpu_custom_call.1} parent=1 // pred_region
      %40 = dma.done [#allocation3], 256
    $region17: #{tpu_custom_call.1} parent=1 // pred_fallthru
      _
    // Predicated region
    $region18: #{tpu_custom_call.1} parent=1 // pred_check
      _
    $region19: #{tpu_custom_call.1} parent=1 // pred_check_branch
      %42 = sbr.rel (0) target = $region21
    $region20: #{tpu_custom_call.1} parent=1 // pred_region
      %44 = dma.done [#allocation6], 16
    $region21: #{tpu_custom_call.1} parent=1 // pred_fallthru
      _
    %v45 = vld [vmem:[#allocation2] sm:$0xff]
    %v46 = vld [vmem:[#allocation2 + $0x8] sm:$0xff]
    %vm47 = vcmask 261120
    %v48 = vsel %vm47, %v45, 0.0
    %49 = vadd.xlane.f32.xlu0 %v48
    %v50 = vpop.xlane.xlu0 %49
    %v51 = vsel %vm47, %v46, 0.0
    %52 = vadd.xlane.f32.xlu0 %v51
    %v53 = vpop.xlane.xlu0 %52
    %v54 = vrcp.pop 32.0
    %v55 = vmul.f32 32.0, %v54
    %v56 = vsub.f32 1.0, %v55
    %v57 = vmul.f32 %v54, %v56
    %v58 = vadd.f32 %v54, %v57
    %vm59 = vweird.f32 %v54
    %v60 = vsel %vm59, %v54, %v58
    %v61 = vmul.f32 %v50, %v60
    %v62 = vmul.f32 %v53, %v60
    %v63 = vsub.f32 %v45, %v61
    %v64 = vsub.f32 %v46, %v62
    %v65 = vmul.f32 %v63, %v63
    %v66 = vmul.f32 %v64, %v64
    %v67 = vsel %vm47, %v65, 0.0
    %68 = vadd.xlane.f32.xlu0 %v67
    %v69 = vpop.xlane.xlu0 %68
    %v70 = vsel %vm47, %v66, 0.0
    %71 = vadd.xlane.f32.xlu0 %v70
    %v72 = vpop.xlane.xlu0 %71
    %v73 = vrcp.pop 31.0
    %v74 = vmul.f32 31.0, %v73
    %v75 = vsub.f32 1.0, %v74
    %v76 = vmul.f32 %v73, %v75
    %v77 = vadd.f32 %v73, %v76
    %vm78 = vweird.f32 %v73
    %v79 = vsel %vm78, %v73, %v77
    %v80 = vmul.f32 %v69, %v79
    %v81 = vmul.f32 %v72, %v79
    %v82 = vrsqrt.pop %v80
    %v83 = vmul.f32 %v82, %v80
    %v84 = vmul.f32 %v83, %v82
    %v85 = vmul.f32 0.5, %v84
    %v86 = vsub.f32 1.5, %v85
    %v87 = vmul.f32 %v82, %v86
    %v88 = vmul.f32 %v80, %v87
    %vm89 = vcmp.eq.f32.partialorder %v80, inf
    %v90 = vsel %vm89, %v80, %v88
    %vm91 = vcmp.eq.f32.partialorder %v80, 0.0
    %v92 = vand.u32 %v80, 2147483648
    %v93 = vsel %vm91, %v92, %v90
    %v94 = vrsqrt.pop %v81
    %v95 = vmul.f32 %v94, %v81
    %v96 = vmul.f32 %v95, %v94
    %v97 = vmul.f32 0.5, %v96
    %v98 = vsub.f32 1.5, %v97
    %v99 = vmul.f32 %v94, %v98
    %v100 = vmul.f32 %v81, %v99
    %vm101 = vcmp.eq.f32.partialorder %v81, inf
    %v102 = vsel %vm101, %v81, %v100
    %vm103 = vcmp.eq.f32.partialorder %v81, 0.0
    %v104 = vand.u32 %v81, 2147483648
    %v105 = vsel %vm103, %v104, %v102
    %v106 = vadd.f32 %v93, 1e-06
    %v107 = vadd.f32 %v105, 1e-06
    %v108 = vrcp.pop %v106
    %v109 = vmul.f32 %v106, %v108
    %v110 = vsub.f32 1.0, %v109
    %v111 = vmul.f32 %v108, %v110
    %v112 = vadd.f32 %v108, %v111
    %vm113 = vweird.f32 %v106
    %vm114 = vweird.f32 %v108
    %vm115 = vmor %vm113, %vm114
    %v116 = vsel %vm115, %v108, %v112
    %v117 = vand.u32 2147483647, %v106
    %vm118 = vcmp.eq.f32.partialorder %v117, 8.507059e+37
    %v119 = vand.u32 %v106, 2147483648
    %v120 = vor.u32 1.1754944e-38, %v119
    %v121 = vsel %vm118, %v120, %v116
    %v122 = vrcp.pop %v107
    %v123 = vmul.f32 %v107, %v122
    %v124 = vsub.f32 1.0, %v123
    %v125 = vmul.f32 %v122, %v124
    %v126 = vadd.f32 %v122, %v125
    %vm127 = vweird.f32 %v107
    %vm128 = vweird.f32 %v122
    %vm129 = vmor %vm127, %vm128
    %v130 = vsel %vm129, %v122, %v126
    %v131 = vand.u32 2147483647, %v107
    %vm132 = vcmp.eq.f32.partialorder %v131, 8.507059e+37
    %v133 = vand.u32 %v107, 2147483648
    %v134 = vor.u32 1.1754944e-38, %v133
    %v135 = vsel %vm132, %v134, %v130
    %v136 = vld [vmem:[#allocation5] sm:$0x1]
    %v137 = vld [vmem:[%s2] sm:$0x1]
    %v138 = vmul.f32 %v63, %v121
    %v139 = vmul.f32 %v64, %v135
    %v141 = vperm.slane %v136, 0
    %v143 = vmul.f32 %v138, %v141
    %v144 = vmul.f32 %v139, %v141
    %v146 = vperm.slane %v137, 0
    %v148 = vadd.f32 %v143, %v146
    %v149 = vadd.f32 %v144, %v146
    %150 = vst.msk [vmem:[#allocation7] sm:$0xff] %vm47, %v148
    %151 = vst.msk [vmem:[#allocation7 + $0x8] sm:$0xff] %vm47, %v149
    // Predicated region
    $region22: #{tpu_custom_call.1} parent=1 // pred_check
      _
    $region23: #{tpu_custom_call.1} parent=1 // pred_check_branch
      %153 = sbr.rel (0) target = $region25
    $region24: #{tpu_custom_call.1} parent=1 // pred_region
      %155 = vsyncadd [#allocation4], 0
      %s156 = sshll.u32 [#allocation7], 4
      %s157 = int_to_ptr.vmem [resolvable:$true] %s156
      %s158 = sshll.u32 %s3, 4
      %s159 = int_to_ptr.hbm [resolvable:$true] %s158
      %164 = dma.vmem_to_hbm [thread:$0]  %s157, 256, %s159, [#allocation4], 128, 128, 8
    $region25: #{tpu_custom_call.1} parent=1 // pred_fallthru
      _
    // Predicated region
    $region26: #{tpu_custom_call.1} parent=1 // pred_check
      _
    $region27: #{tpu_custom_call.1} parent=1 // pred_check_branch
      %166 = sbr.rel (0) target = $region29
    $region28: #{tpu_custom_call.1} parent=1 // pred_region
      %168 = dma.done [#allocation4], 256
    $region29: #{tpu_custom_call.1} parent=1 // pred_fallthru
      _
    %169 = vsyncpa [#allocation3], 1
    %170 = vsyncpa [#allocation6], 1
    %171 = vsyncpa [#allocation4], 1

</llo_original>
